<compile_context>
chip_gen: v5e
topology: v5e:2x2
jax: 0.10.0
libtpu: 0.0.40
codegen_flags: <defaults>
</compile_context>

<pallas_src>
import functools

import jax
import jax.numpy as jnp
from jax.experimental import pallas as pl
from jax.experimental.pallas import tpu as pltpu


# ----------------------------------------------------------------------------
# Kernel
# ----------------------------------------------------------------------------
def _mlp_kernel(x_ref, w1_ref, b1_ref, w2_ref, b2_ref, w3_ref, b3_ref,
                w4t_ref, b4_ref, o_ref):
    # x tile: (5, T) already bf16 (cast fused into the wrapper transpose/pad).
    x = x_ref[...]

    # fc1 + relu : (32, 5) @ (5, T) -> (32, T); f32 accumulation.
    h = jnp.dot(w1_ref[...], x, preferred_element_type=jnp.float32)
    h = jnp.maximum(h + b1_ref[...], 0.0)

    # fc2 + relu : (32, 32) @ (32, T) -> (32, T)
    h = jnp.dot(w2_ref[...], h.astype(jnp.bfloat16),
                preferred_element_type=jnp.float32)
    h = jnp.maximum(h + b2_ref[...], 0.0)

    # fc3 + relu
    h = jnp.dot(w3_ref[...], h.astype(jnp.bfloat16),
                preferred_element_type=jnp.float32)
    h = jnp.maximum(h + b3_ref[...], 0.0)

    # fc4 (2 output rows) on the VPU/XLU instead of the MXU:
    #   y[o, t] = sum_k w4[o, k] * h[k, t] + b4[o]
    # w4t is the pre-transposed (32, 2) f32 weight; each column broadcasts
    # along lanes and the sum over the 32 sublanes goes to the XLU.  Uses the
    # f32 h directly (no bf16 cast, no MXU push for a 2-row result).
    w4t = w4t_ref[...]                                            # (32, 2) f32
    y0 = jnp.sum(w4t[:, 0:1] * h, axis=0, keepdims=True)          # (1, T)
    y1 = jnp.sum(w4t[:, 1:2] * h, axis=0, keepdims=True)          # (1, T)
    y = jnp.concatenate([y0, y1], axis=0) + b4_ref[...]           # (2, T)
    o_ref[...] = y.astype(o_ref.dtype)


# ----------------------------------------------------------------------------
# Wrapper
# ----------------------------------------------------------------------------
_LANE = 128
_MAX_TILE = 4096


def _choose_tiling(n):
    """Bucket n_pad (compile-churn control) and pick a megacore-friendly tile."""
    lanes = pl.cdiv(max(n, 1), _LANE)
    if lanes * _LANE <= 4 * _MAX_TILE:
        # Power-of-two bucket of the lane count: few distinct compiled shapes.
        n_pad = pl.next_power_of_2(lanes) * _LANE
        if n_pad <= 2048:
            tile = n_pad                      # single grid step
        else:
            # >= 4 grid steps -> both v7x TensorCores get >= 2 steps each,
            # while keeping per-step pipeline overhead (~0.35 us) small.
            tile = max(1024, min(_MAX_TILE, n_pad // 4))
    else:
        n_pad = pl.cdiv(n, _MAX_TILE) * _MAX_TILE
        tile = _MAX_TILE
    return n_pad, tile


@functools.partial(jax.jit, static_argnames=("n_pad", "tile_n"))
def _forward_impl(x, w1, b1, w2, b2, w3, b3, w4t, b4, *, n_pad, tile_n):
    n = x.shape[0]

    # Single fused XLA op: transpose to feature-major, cast to bf16 (halves
    # the x DMA per tile), pad the tail columns to the tile multiple.
    xt = jnp.pad(x.T.astype(jnp.bfloat16), ((0, 0), (0, n_pad - n)))

    full = lambda i: (0, 0)  # weights/biases: same resident block every step

    out = pl.pallas_call(
        _mlp_kernel,
        out_shape=jax.ShapeDtypeStruct((2, n_pad), jnp.float32),
        grid_spec=pltpu.PrefetchScalarGridSpec(
            num_scalar_prefetch=0,
            grid=(n_pad // tile_n,),
            in_specs=[
                pl.BlockSpec((5, tile_n), lambda i: (0, i)),   # x column tile
                pl.BlockSpec(w1.shape, full),                  # (32, 5)  bf16
                pl.BlockSpec(b1.shape, full),                  # (32, 1)  f32
                pl.BlockSpec(w2.shape, full),                  # (32, 32) bf16
                pl.BlockSpec(b2.shape, full),                  # (32, 1)  f32
                pl.BlockSpec(w3.shape, full),                  # (32, 32) bf16
                pl.BlockSpec(b3.shape, full),                  # (32, 1)  f32
                pl.BlockSpec(w4t.shape, full),                 # (32, 2)  f32
                pl.BlockSpec(b4.shape, full),                  # (2, 1)   f32
            ],
            out_specs=pl.BlockSpec((2, tile_n), lambda i: (0, i)),
        ),
        compiler_params=pltpu.CompilerParams(
            dimension_semantics=("parallel",)),
    )(xt, w1, b1, w2, b2, w3, b3, w4t, b4)

    # Tail columns of the padded output contain ReLU(bias)-propagated garbage;
    # the :n slice (fused with the transpose back to row-major) removes it.
    return out[:, :n].T


def prepare_params(params):
    """One-time parameter prep (hoisted out of the per-call forward path).

    params: (w1, b1, w2, b2, w3, b3, w4, b4) in torch nn.Linear (out, in)
    layout.  Returns device-ready tensors: bf16 weights for the MXU layers,
    f32 (out, 1) bias columns, and the fc4 weight pre-transposed to (32, 2)
    f32 for the in-kernel VPU/XLU path.
    """
    w1, b1, w2, b2, w3, b3, w4, b4 = params
    return (
        jnp.asarray(w1, jnp.bfloat16), jnp.asarray(b1, jnp.float32).reshape(-1, 1),
        jnp.asarray(w2, jnp.bfloat16), jnp.asarray(b2, jnp.float32).reshape(-1, 1),
        jnp.asarray(w3, jnp.bfloat16), jnp.asarray(b3, jnp.float32).reshape(-1, 1),
        jnp.asarray(w4, jnp.float32).T, jnp.asarray(b4, jnp.float32).reshape(-1, 1),
    )


def bgrxy_mlp_forward(x, prepared_params, *, tile_n=None):
    """Fused 4-layer MLP forward. x: (N, 5) -> (N, 2)."""
    n, in_dim = x.shape
    assert in_dim == 5
    if tile_n is None:
        n_pad, t = _choose_tiling(n)
    else:
        assert tile_n % _LANE == 0
        t = tile_n
        n_pad = pl.cdiv(n, t) * t
    return _forward_impl(x, *prepared_params, n_pad=n_pad, tile_n=t)


# ----------------------------------------------------------------------------
# Params / references
# ----------------------------------------------------------------------------
def init_params(key, dtype=jnp.float32):
    """Deterministic synthetic params, BGRXYMLPNet shapes, torch (out, in) layout."""
    dims = [(32, 5), (32, 32), (32, 32), (2, 32)]
    params = []
    for (dout, din) in dims:
        key, kw, kb = jax.random.split(key, 3)
        bound = 1.0 / (din ** 0.5)          # torch default init range
        w = jax.random.uniform(kw, (dout, din), dtype, -bound, bound)
        b = jax.random.uniform(kb, (dout,), dtype, -bound, bound)
        params += [w, b]
    return tuple(params)


def reference_forward_f32(x, params):
    """Pure-f32 reference (the PyTorch module's math)."""
    w1, b1, w2, b2, w3, b3, w4, b4 = params
    h = jnp.maximum(x @ w1.T + b1, 0.0)
    h = jnp.maximum(h @ w2.T + b2, 0.0)
    h = jnp.maximum(h @ w3.T + b3, 0.0)
    return h @ w4.T + b4


def reference_forward_mixed(x, params):
    """Reference matching the kernel precision: bf16 operands for fc1..fc3
    with f32 accumulation, fc4 in full f32."""
    w1, b1, w2, b2, w3, b3, w4, b4 = params

    def mm(a, w):
        return jnp.dot(a.astype(jnp.bfloat16), w.T.astype(jnp.bfloat16),
                       preferred_element_type=jnp.float32)

    h = jnp.maximum(mm(x, w1) + b1, 0.0)
    h = jnp.maximum(mm(h, w2) + b2, 0.0)
    h = jnp.maximum(mm(h, w3) + b3, 0.0)
    return h @ w4.T.astype(jnp.float32) + b4


# ----------------------------------------------------------------------------
# Self-test
# ----------------------------------------------------------------------------
if __name__ == "__main__":
    key = jax.random.PRNGKey(0)
    kp, kx1, kx2, kx3 = jax.random.split(key, 4)

    params = init_params(kp)
    prepared = prepare_params(params)   # one-time prep, reused across calls

    # Case 1: small batch, N not a lane multiple -> single grid step,
    # exercises the fused transpose/cast/pad tail path.
    x1 = jax.random.uniform(kx1, (200, 5), jnp.float32)
    out1 = jax.block_until_ready(bgrxy_mlp_forward(x1, prepared))
    assert out1.shape == (200, 2)
    assert jnp.allclose(out1, reference_forward_mixed(x1, params),
                        atol=2e-3, rtol=2e-3)
    assert jnp.allclose(out1, reference_forward_f32(x1, params),
                        atol=5e-2, rtol=5e-2)

    # Case 2: forced small tile -> multi-step grid, exercises the pipelined
    # column loop and the lane-dense output writeback across several tiles.
    x2 = jax.random.uniform(kx2, (1000, 5), jnp.float32)
    out2 = jax.block_until_ready(bgrxy_mlp_forward(x2, prepared, tile_n=256))
    assert out2.shape == (1000, 2)
    assert jnp.allclose(out2, reference_forward_mixed(x2, params),
                        atol=2e-3, rtol=2e-3)

    # Case 3: default tiling at a size that triggers bucketing + a >=4-step
    # grid (megacore-friendly split on v7x).
    x3 = jax.random.uniform(kx3, (5000, 5), jnp.float32)
    out3 = jax.block_until_ready(bgrxy_mlp_forward(x3, prepared))
    assert out3.shape == (5000, 2)
    assert jnp.allclose(out3, reference_forward_mixed(x3, params),
                        atol=2e-3, rtol=2e-3)

    print("KERNEL_OK")
</pallas_src>

<mosaic_0001>
module attributes {stable_mosaic.version = 11 : i64} {
  func.func @_mlp_kernel(%arg0: i32, %arg1: memref<5x256xbf16, #tpu.memory_space<vmem>>, %arg2: memref<32x5xbf16, #tpu.memory_space<vmem>>, %arg3: memref<32x1xf32, #tpu.memory_space<vmem>>, %arg4: memref<32x32xbf16, #tpu.memory_space<vmem>>, %arg5: memref<32x1xf32, #tpu.memory_space<vmem>>, %arg6: memref<32x32xbf16, #tpu.memory_space<vmem>>, %arg7: memref<32x1xf32, #tpu.memory_space<vmem>>, %arg8: memref<32x2xf32, #tpu.memory_space<vmem>>, %arg9: memref<2x1xf32, #tpu.memory_space<vmem>>, %arg10: memref<2x256xf32, #tpu.memory_space<vmem>>) attributes {dimension_semantics = [#tpu.dimension_semantics<parallel>], iteration_bounds = array<i64: 1>, scalar_prefetch = 0 : i64, scratch_operands = 0 : i64, tpu.core_type = #tpu.core_type<tc>, window_params = [{transform_indices = @transform_0, window_bounds = array<i64: 5, 256>}, {pipeline_mode = #tpu.pipeline_mode<synchronous>, transform_indices = @transform_1, window_bounds = array<i64: 32, 5>}, {pipeline_mode = #tpu.pipeline_mode<synchronous>, transform_indices = @transform_2, window_bounds = array<i64: 32, 1>}, {pipeline_mode = #tpu.pipeline_mode<synchronous>, transform_indices = @transform_3, window_bounds = array<i64: 32, 32>}, {pipeline_mode = #tpu.pipeline_mode<synchronous>, transform_indices = @transform_4, window_bounds = array<i64: 32, 1>}, {pipeline_mode = #tpu.pipeline_mode<synchronous>, transform_indices = @transform_5, window_bounds = array<i64: 32, 32>}, {pipeline_mode = #tpu.pipeline_mode<synchronous>, transform_indices = @transform_6, window_bounds = array<i64: 32, 1>}, {pipeline_mode = #tpu.pipeline_mode<synchronous>, transform_indices = @transform_7, window_bounds = array<i64: 32, 2>}, {pipeline_mode = #tpu.pipeline_mode<synchronous>, transform_indices = @transform_8, window_bounds = array<i64: 2, 1>}, {transform_indices = @transform_9, window_bounds = array<i64: 2, 256>}]} {
    %c0 = arith.constant 0 : index
    %c0_0 = arith.constant 0 : index
    %0 = vector.load %arg1[%c0, %c0_0] : memref<5x256xbf16, #tpu.memory_space<vmem>>, vector<5x256xbf16>
    %c0_1 = arith.constant 0 : index
    %c0_2 = arith.constant 0 : index
    %1 = vector.load %arg2[%c0_1, %c0_2] : memref<32x5xbf16, #tpu.memory_space<vmem>>, vector<32x5xbf16>
    %cst = arith.constant dense<0.000000e+00> : vector<32x256xf32>
    %2 = tpu.matmul %1, %0, %cst {dimension_numbers = #tpu.dot_dimension_numbers<[1], [0], [0], [1], [0, 0, 1, 1], [], []>} : vector<32x5xbf16>, vector<5x256xbf16>, vector<32x256xf32> -> vector<32x256xf32>
    %c0_3 = arith.constant 0 : index
    %c0_4 = arith.constant 0 : index
    %3 = vector.load %arg3[%c0_3, %c0_4] : memref<32x1xf32, #tpu.memory_space<vmem>>, vector<32x1xf32>
    %4 = vector.broadcast %3 : vector<32x1xf32> to vector<32x256xf32>
    %5 = arith.addf %2, %4 : vector<32x256xf32>
    %cst_5 = arith.constant 0.000000e+00 : f32
    %6 = vector.broadcast %cst_5 : f32 to vector<32x256xf32>
    %7 = arith.maximumf %5, %6 : vector<32x256xf32>
    %c0_6 = arith.constant 0 : index
    %c0_7 = arith.constant 0 : index
    %8 = vector.load %arg4[%c0_6, %c0_7] : memref<32x32xbf16, #tpu.memory_space<vmem>>, vector<32x32xbf16>
    %9 = arith.truncf %7 : vector<32x256xf32> to vector<32x256xbf16>
    %cst_8 = arith.constant dense<0.000000e+00> : vector<32x256xf32>
    %10 = tpu.matmul %8, %9, %cst_8 {dimension_numbers = #tpu.dot_dimension_numbers<[1], [0], [0], [1], [0, 0, 1, 1], [], []>} : vector<32x32xbf16>, vector<32x256xbf16>, vector<32x256xf32> -> vector<32x256xf32>
    %c0_9 = arith.constant 0 : index
    %c0_10 = arith.constant 0 : index
    %11 = vector.load %arg5[%c0_9, %c0_10] : memref<32x1xf32, #tpu.memory_space<vmem>>, vector<32x1xf32>
    %12 = vector.broadcast %11 : vector<32x1xf32> to vector<32x256xf32>
    %13 = arith.addf %10, %12 : vector<32x256xf32>
    %cst_11 = arith.constant 0.000000e+00 : f32
    %14 = vector.broadcast %cst_11 : f32 to vector<32x256xf32>
    %15 = arith.maximumf %13, %14 : vector<32x256xf32>
    %c0_12 = arith.constant 0 : index
    %c0_13 = arith.constant 0 : index
    %16 = vector.load %arg6[%c0_12, %c0_13] : memref<32x32xbf16, #tpu.memory_space<vmem>>, vector<32x32xbf16>
    %17 = arith.truncf %15 : vector<32x256xf32> to vector<32x256xbf16>
    %cst_14 = arith.constant dense<0.000000e+00> : vector<32x256xf32>
    %18 = tpu.matmul %16, %17, %cst_14 {dimension_numbers = #tpu.dot_dimension_numbers<[1], [0], [0], [1], [0, 0, 1, 1], [], []>} : vector<32x32xbf16>, vector<32x256xbf16>, vector<32x256xf32> -> vector<32x256xf32>
    %c0_15 = arith.constant 0 : index
    %c0_16 = arith.constant 0 : index
    %19 = vector.load %arg7[%c0_15, %c0_16] : memref<32x1xf32, #tpu.memory_space<vmem>>, vector<32x1xf32>
    %20 = vector.broadcast %19 : vector<32x1xf32> to vector<32x256xf32>
    %21 = arith.addf %18, %20 : vector<32x256xf32>
    %cst_17 = arith.constant 0.000000e+00 : f32
    %22 = vector.broadcast %cst_17 : f32 to vector<32x256xf32>
    %23 = arith.maximumf %21, %22 : vector<32x256xf32>
    %c0_18 = arith.constant 0 : index
    %c0_19 = arith.constant 0 : index
    %24 = vector.load %arg8[%c0_18, %c0_19] : memref<32x2xf32, #tpu.memory_space<vmem>>, vector<32x2xf32>
    %25 = vector.extract_strided_slice %24 {offsets = [0, 0], sizes = [32, 1], strides = [1, 1]} : vector<32x2xf32> to vector<32x1xf32>
    %26 = vector.broadcast %25 : vector<32x1xf32> to vector<32x256xf32>
    %27 = arith.mulf %26, %23 : vector<32x256xf32>
    %cst_20 = arith.constant dense<0.000000e+00> : vector<256xf32>
    %28 = vector.multi_reduction <add>, %27, %cst_20 [0] : vector<32x256xf32> to vector<256xf32>
    %29 = vector.shape_cast %28 : vector<256xf32> to vector<1x256xf32>
    %30 = vector.extract_strided_slice %24 {offsets = [0, 1], sizes = [32, 1], strides = [1, 1]} : vector<32x2xf32> to vector<32x1xf32>
    %31 = vector.broadcast %30 : vector<32x1xf32> to vector<32x256xf32>
    %32 = arith.mulf %31, %23 : vector<32x256xf32>
    %cst_21 = arith.constant dense<0.000000e+00> : vector<256xf32>
    %33 = vector.multi_reduction <add>, %32, %cst_21 [0] : vector<32x256xf32> to vector<256xf32>
    %34 = vector.shape_cast %33 : vector<256xf32> to vector<1x256xf32>
    %35 = tpu.concatenate %29, %34 in 0 : vector<1x256xf32>, vector<1x256xf32> -> vector<2x256xf32>
    %c0_22 = arith.constant 0 : index
    %c0_23 = arith.constant 0 : index
    %36 = vector.load %arg9[%c0_22, %c0_23] : memref<2x1xf32, #tpu.memory_space<vmem>>, vector<2x1xf32>
    %37 = vector.broadcast %36 : vector<2x1xf32> to vector<2x256xf32>
    %38 = arith.addf %35, %37 : vector<2x256xf32>
    %c0_24 = arith.constant 0 : index
    %c0_25 = arith.constant 0 : index
    %39 = vector.load %arg10[%c0_24, %c0_25] : memref<2x256xf32, #tpu.memory_space<vmem>>, vector<2x256xf32>
    tpu.vector_store %arg10[%c0_24, %c0_25], %38 {strides = array<i32>} : memref<2x256xf32, #tpu.memory_space<vmem>>, vector<2x256xf32>,
    return
  }
  func.func @transform_0(%arg0: i32) -> (i32, i32) {
    %c0_i32 = arith.constant 0 : i32
    %c0_i32_0 = arith.constant 0 : i32
    return %c0_i32, %arg0 : i32, i32
  }
  func.func @transform_1(%arg0: i32) -> (i32, i32) {
    %c0_i32 = arith.constant 0 : i32
    %c0_i32_0 = arith.constant 0 : i32
    %c0_i32_1 = arith.constant 0 : i32
    return %c0_i32, %c0_i32_0 : i32, i32
  }
  func.func @transform_2(%arg0: i32) -> (i32, i32) {
    %c0_i32 = arith.constant 0 : i32
    %c0_i32_0 = arith.constant 0 : i32
    %c0_i32_1 = arith.constant 0 : i32
    return %c0_i32, %c0_i32_0 : i32, i32
  }
  func.func @transform_3(%arg0: i32) -> (i32, i32) {
    %c0_i32 = arith.constant 0 : i32
    %c0_i32_0 = arith.constant 0 : i32
    %c0_i32_1 = arith.constant 0 : i32
    return %c0_i32, %c0_i32_0 : i32, i32
  }
  func.func @transform_4(%arg0: i32) -> (i32, i32) {
    %c0_i32 = arith.constant 0 : i32
    %c0_i32_0 = arith.constant 0 : i32
    %c0_i32_1 = arith.constant 0 : i32
    return %c0_i32, %c0_i32_0 : i32, i32
  }
  func.func @transform_5(%arg0: i32) -> (i32, i32) {
    %c0_i32 = arith.constant 0 : i32
    %c0_i32_0 = arith.constant 0 : i32
    %c0_i32_1 = arith.constant 0 : i32
    return %c0_i32, %c0_i32_0 : i32, i32
  }
  func.func @transform_6(%arg0: i32) -> (i32, i32) {
    %c0_i32 = arith.constant 0 : i32
    %c0_i32_0 = arith.constant 0 : i32
    %c0_i32_1 = arith.constant 0 : i32
    return %c0_i32, %c0_i32_0 : i32, i32
  }
  func.func @transform_7(%arg0: i32) -> (i32, i32) {
    %c0_i32 = arith.constant 0 : i32
    %c0_i32_0 = arith.constant 0 : i32
    %c0_i32_1 = arith.constant 0 : i32
    return %c0_i32, %c0_i32_0 : i32, i32
  }
  func.func @transform_8(%arg0: i32) -> (i32, i32) {
    %c0_i32 = arith.constant 0 : i32
    %c0_i32_0 = arith.constant 0 : i32
    %c0_i32_1 = arith.constant 0 : i32
    return %c0_i32, %c0_i32_0 : i32, i32
  }
  func.func @transform_9(%arg0: i32) -> (i32, i32) {
    %c0_i32 = arith.constant 0 : i32
    %c0_i32_0 = arith.constant 0 : i32
    return %c0_i32, %arg0 : i32, i32
  }
}

</mosaic_0001>

<llo_original>
// kernel: _forward_impl.1
$region0: #{_forward_impl.1}
  #allocation0 [shape = 'u32[]', space=smem, size = 0x4, offset = 0x4, fixed_abs, tag = 'smem constant byte address 0x4 - core index']
  #allocation1 [shape = 'u32[72,128]{1,0:T(1,128)}', space=vmem, size = 0x9000, scoped, tag = 'internal scratch']
  %s0 = inlined_call_operand.vmem [shape: bf16[5,256], index: 0, kind: input, shape index: {}]
  %s1 = inlined_call_operand.vmem [shape: bf16[32,5], index: 1, kind: input, shape index: {}]
  %s2 = inlined_call_operand.vmem [shape: f32[32,1], index: 2, kind: input, shape index: {}]
  %s3 = inlined_call_operand.vmem [shape: bf16[32,32], index: 3, kind: input, shape index: {}]
  %s4 = inlined_call_operand.vmem [shape: f32[32,1], index: 4, kind: input, shape index: {}]
  %s5 = inlined_call_operand.vmem [shape: bf16[32,32], index: 5, kind: input, shape index: {}]
  %s6 = inlined_call_operand.vmem [shape: f32[32,1], index: 6, kind: input, shape index: {}]
  %s7 = inlined_call_operand.vmem [shape: f32[32,2], index: 7, kind: input, shape index: {}]
  %s8 = inlined_call_operand.vmem [shape: f32[2,1], index: 8, kind: input, shape index: {}]
  %s9 = inlined_call_operand.vmem [shape: f32[2,256], index: 9, kind: output, shape index: {}]
  %s10 = sld [smem:[#allocation0]]
  $region46: #{_forward_impl.1} parent=0
    _
  %s12 = ssub.s32 1, %s10
  %s13 = scalar_select 0, %s12, %s10
  // Predicated region
  $region2: #{_forward_impl.1} parent=0 // pred_check
    _
  $region3: #{_forward_impl.1} parent=0 // pred_check_branch
    %15 = sbr.rel (0) target = $region5
  $region4: #{_forward_impl.1} parent=0 // pred_region
    _
  $region5: #{_forward_impl.1} parent=0 // pred_fallthru
    _
  // Predicated region
  $region6: #{_forward_impl.1} parent=0 // pred_check
    _
  $region7: #{_forward_impl.1} parent=0 // pred_check_branch
    %17 = sbr.rel (0) target = $region9
  $region8: #{_forward_impl.1} parent=0 // pred_region
    _
  $region9: #{_forward_impl.1} parent=0 // pred_fallthru
    _
  // Predicated region
  $region10: #{_forward_impl.1} parent=0 // pred_check
    _
  $region11: #{_forward_impl.1} parent=0 // pred_check_branch
    %19 = sbr.rel (0) target = $region13
  $region12: #{_forward_impl.1} parent=0 // pred_region
    _
  $region13: #{_forward_impl.1} parent=0 // pred_fallthru
    _
  // Predicated region
  $region14: #{_forward_impl.1} parent=0 // pred_check
    _
  $region15: #{_forward_impl.1} parent=0 // pred_check_branch
    %21 = sbr.rel (0) target = $region17
  $region16: #{_forward_impl.1} parent=0 // pred_region
    _
  $region17: #{_forward_impl.1} parent=0 // pred_fallthru
    _
  // Predicated region
  $region18: #{_forward_impl.1} parent=0 // pred_check
    _
  $region19: #{_forward_impl.1} parent=0 // pred_check_branch
    %23 = sbr.rel (0) target = $region21
  $region20: #{_forward_impl.1} parent=0 // pred_region
    _
  $region21: #{_forward_impl.1} parent=0 // pred_fallthru
    _
  // Predicated region
  $region22: #{_forward_impl.1} parent=0 // pred_check
    _
  $region23: #{_forward_impl.1} parent=0 // pred_check_branch
    %25 = sbr.rel (0) target = $region25
  $region24: #{_forward_impl.1} parent=0 // pred_region
    _
  $region25: #{_forward_impl.1} parent=0 // pred_fallthru
    _
  // Predicated region
  $region26: #{_forward_impl.1} parent=0 // pred_check
    _
  $region27: #{_forward_impl.1} parent=0 // pred_check_branch
    %27 = sbr.rel (0) target = $region29
  $region28: #{_forward_impl.1} parent=0 // pred_region
    _
  $region29: #{_forward_impl.1} parent=0 // pred_fallthru
    _
  // Predicated region
  $region30: #{_forward_impl.1} parent=0 // pred_check
    _
  $region31: #{_forward_impl.1} parent=0 // pred_check_branch
    %29 = sbr.rel (0) target = $region33
  $region32: #{_forward_impl.1} parent=0 // pred_region
    _
  $region33: #{_forward_impl.1} parent=0 // pred_fallthru
    _
  // Predicated region
  $region34: #{_forward_impl.1} parent=0 // pred_check
    _
  $region35: #{_forward_impl.1} parent=0 // pred_check_branch
    %31 = sbr.rel (0) target = $region37
  $region36: #{_forward_impl.1} parent=0 // pred_region
    _
  $region37: #{_forward_impl.1} parent=0 // pred_fallthru
    _
  %v33 = vld [vmem:[%s0] sm:$0x77]
  %v34 = vld [vmem:[%s1] sm:$0xf]
  %v35 = vld [vmem:[%s1 + $0x4] sm:$0xf]
  %v36 = vld [vmem:[%s1 + $0x8] sm:$0xf]
  %v37 = vld [vmem:[%s1 + $0xc] sm:$0xf]
  %v38 = vld [vmem:[%s2] sm:$0xff]
  %v39 = vld [vmem:[%s2 + $0x8] sm:$0xff]
  %v40 = vld [vmem:[%s2 + $0x10] sm:$0xff]
  %v41 = vld [vmem:[%s2 + $0x18] sm:$0xff]
  %43 = vset.pattern.permute.xlu0 0
  %44 = vperm.xlu0 %43, %v38
  %v45 = vpop.permute.xlu0 %44
  %48 = vset.pattern.permute.xlu0 0
  %49 = vperm.xlu0 %48, %v39
  %v50 = vpop.permute.xlu0 %49
  %53 = vset.pattern.permute.xlu0 0
  %54 = vperm.xlu0 %53, %v40
  %v55 = vpop.permute.xlu0 %54
  %58 = vset.pattern.permute.xlu0 0
  %59 = vperm.xlu0 %58, %v41
  %v60 = vpop.permute.xlu0 %59
  %v66 = vunpack.c.l.b16 %v34
  %v67 = vunpack.c.l.b16 %v35
  %v68 = vunpack.c.l.b16 %v36
  %v69 = vunpack.c.l.b16 %v37
  %v70 = vpack.c.b16 %v67, %v66
  %v71 = vpack.c.b16 %v69, %v68
  %v73 = vunpack.c.l.b16 %v33
  %v74 = vunpack.c.h.b16 %v33
  %v75 = vpack.c.b16 %v73, %v73
  %v76 = vpack.c.b16 %v74, %v74
  %vm77 = vcmask 39936
  %v79 = vsel %vm77, %v70, 0
  %v82 = vsel %vm77, %v71, 0
  %vm84 = vcmask 1041408
  %vm85 = vcmask 1042432
  %v86 = vsel %vm84, 4294967295, 65535
  %v87 = vsel %vm85, %v86, 0
  %v89 = vand.u32 %v75, %v87
  %v92 = vand.u32 %v76, %v87
  %94 = vmatpush.bf16.msra.mxu0 0
  %95 = vmatpush.bf16.msra.mxu0 0
  %96 = vmatpush.bf16.msra.mxu0 0
  %97 = vmatpush.bf16.msra.mxu0 0
  %98 = vmatpush.bf16.msra.mxu0 0
  %99 = vmatpush.bf16.msra.mxu0 0
  %100 = vmatpush.bf16.msra.mxu0 0
  %101 = vmatpush.bf16.msra.mxu0 %v89
  %102 = vmatmul.bf16.gmra.mxu0 %v79
  %v103 = vpop.f32.mrf.mxu0
  %v104 = vadd.f32 %v45, %v103
  %v105 = vpop.f32.mrf.mxu0
  %v106 = vadd.f32 %v50, %v105
  %107 = vmatmul.bf16.gmra.mxu0 %v82
  %v108 = vpop.f32.mrf.mxu0
  %v109 = vadd.f32 %v55, %v108
  %v110 = vpop.f32.mrf.mxu0
  %v111 = vadd.f32 %v60, %v110
  %112 = vdwg.mxu0
  %113 = vmatpush.bf16.msra.mxu0 0
  %114 = vmatpush.bf16.msra.mxu0 0
  %115 = vmatpush.bf16.msra.mxu0 0
  %116 = vmatpush.bf16.msra.mxu0 0
  %117 = vmatpush.bf16.msra.mxu0 0
  %118 = vmatpush.bf16.msra.mxu0 0
  %119 = vmatpush.bf16.msra.mxu0 0
  %120 = vmatpush.bf16.msra.mxu0 %v92
  %121 = vmatmul.bf16.gmra.mxu0 %v79
  %v122 = vpop.f32.mrf.mxu0
  %v123 = vadd.f32 %v45, %v122
  %v124 = vpop.f32.mrf.mxu0
  %v125 = vadd.f32 %v50, %v124
  %126 = vmatmul.bf16.gmra.mxu0 %v82
  %v127 = vpop.f32.mrf.mxu0
  %v128 = vadd.f32 %v55, %v127
  %v129 = vpop.f32.mrf.mxu0
  %v130 = vadd.f32 %v60, %v129
  %131 = vdwg.mxu0
  %v132 = vmax.f32 %v104, 0.0
  %v133 = vmax.f32 %v123, 0.0
  %v134 = vmax.f32 %v106, 0.0
  %v135 = vmax.f32 %v125, 0.0
  %v136 = vmax.f32 %v109, 0.0
  %v137 = vmax.f32 %v128, 0.0
  %v138 = vmax.f32 %v111, 0.0
  %v139 = vmax.f32 %v130, 0.0
  %v140 = vld [vmem:[%s3] sm:$0xf]
  %v141 = vld [vmem:[%s3 + $0x4] sm:$0xf]
  %v142 = vld [vmem:[%s3 + $0x8] sm:$0xf]
  %v143 = vld [vmem:[%s3 + $0xc] sm:$0xf]
  %v144 = vpack.c.bf16 %v134, %v132
  %v145 = vpack.c.bf16 %v135, %v133
  %v146 = vpack.c.bf16 %v138, %v136
  %v147 = vpack.c.bf16 %v139, %v137
  %v148 = vld [vmem:[%s4] sm:$0xff]
  %v149 = vld [vmem:[%s4 + $0x8] sm:$0xff]
  %v150 = vld [vmem:[%s4 + $0x10] sm:$0xff]
  %v151 = vld [vmem:[%s4 + $0x18] sm:$0xff]
  %153 = vset.pattern.permute.xlu0 0
  %154 = vperm.xlu0 %153, %v148
  %v155 = vpop.permute.xlu0 %154
  %158 = vset.pattern.permute.xlu0 0
  %159 = vperm.xlu0 %158, %v149
  %v160 = vpop.permute.xlu0 %159
  %163 = vset.pattern.permute.xlu0 0
  %164 = vperm.xlu0 %163, %v150
  %v165 = vpop.permute.xlu0 %164
  %168 = vset.pattern.permute.xlu0 0
  %169 = vperm.xlu0 %168, %v151
  %v170 = vpop.permute.xlu0 %169
  %v176 = vunpack.c.l.b16 %v140
  %v177 = vunpack.c.l.b16 %v141
  %v178 = vunpack.c.l.b16 %v142
  %v179 = vunpack.c.l.b16 %v143
  %v180 = vpack.c.b16 %v177, %v176
  %v181 = vpack.c.b16 %v179, %v178
  %vm182 = vcmask 261120
  %v184 = vsel %vm182, %v180, 0
  %v187 = vsel %vm182, %v181, 0
  %189 = vmatpush.bf16.msra.mxu0 0
  %190 = vmatpush.bf16.msra.mxu0 0
  %191 = vmatpush.bf16.msra.mxu0 0
  %192 = vmatpush.bf16.msra.mxu0 0
  %193 = vmatpush.bf16.msra.mxu0 0
  %194 = vmatpush.bf16.msra.mxu0 0
  %195 = vmatpush.bf16.msra.mxu0 %v146
  %196 = vmatpush.bf16.msra.mxu0 %v144
  %197 = vmatmul.bf16.gmra.mxu0 %v184
  %v198 = vpop.f32.mrf.mxu0
  %v199 = vadd.f32 %v155, %v198
  %v200 = vpop.f32.mrf.mxu0
  %v201 = vadd.f32 %v160, %v200
  %202 = vmatmul.bf16.gmra.mxu0 %v187
  %v203 = vpop.f32.mrf.mxu0
  %v204 = vadd.f32 %v165, %v203
  %v205 = vpop.f32.mrf.mxu0
  %v206 = vadd.f32 %v170, %v205
  %207 = vdwg.mxu0
  %208 = vmatpush.bf16.msra.mxu0 0
  %209 = vmatpush.bf16.msra.mxu0 0
  %210 = vmatpush.bf16.msra.mxu0 0
  %211 = vmatpush.bf16.msra.mxu0 0
  %212 = vmatpush.bf16.msra.mxu0 0
  %213 = vmatpush.bf16.msra.mxu0 0
  %214 = vmatpush.bf16.msra.mxu0 %v147
  %215 = vmatpush.bf16.msra.mxu0 %v145
  %216 = vmatmul.bf16.gmra.mxu0 %v184
  %v217 = vpop.f32.mrf.mxu0
  %v218 = vadd.f32 %v155, %v217
  %v219 = vpop.f32.mrf.mxu0
  %v220 = vadd.f32 %v160, %v219
  %221 = vmatmul.bf16.gmra.mxu0 %v187
  %v222 = vpop.f32.mrf.mxu0
  %v223 = vadd.f32 %v165, %v222
  %v224 = vpop.f32.mrf.mxu0
  %v225 = vadd.f32 %v170, %v224
  %226 = vdwg.mxu0
  %v227 = vmax.f32 %v199, 0.0
  %v228 = vmax.f32 %v218, 0.0
  %v229 = vmax.f32 %v201, 0.0
  %v230 = vmax.f32 %v220, 0.0
  %v231 = vmax.f32 %v204, 0.0
  %v232 = vmax.f32 %v223, 0.0
  %v233 = vmax.f32 %v206, 0.0
  %v234 = vmax.f32 %v225, 0.0
  %v235 = vld [vmem:[%s5] sm:$0xf]
  %v236 = vld [vmem:[%s5 + $0x4] sm:$0xf]
  %v237 = vld [vmem:[%s5 + $0x8] sm:$0xf]
  %v238 = vld [vmem:[%s5 + $0xc] sm:$0xf]
  %v239 = vpack.c.bf16 %v229, %v227
  %v240 = vpack.c.bf16 %v230, %v228
  %v241 = vpack.c.bf16 %v233, %v231
  %v242 = vpack.c.bf16 %v234, %v232
  %v243 = vld [vmem:[%s6] sm:$0xff]
  %v244 = vld [vmem:[%s6 + $0x8] sm:$0xff]
  %v245 = vld [vmem:[%s6 + $0x10] sm:$0xff]
  %v246 = vld [vmem:[%s6 + $0x18] sm:$0xff]
  %248 = vset.pattern.permute.xlu0 0
  %249 = vperm.xlu0 %248, %v243
  %v250 = vpop.permute.xlu0 %249
  %253 = vset.pattern.permute.xlu0 0
  %254 = vperm.xlu0 %253, %v244
  %v255 = vpop.permute.xlu0 %254
  %258 = vset.pattern.permute.xlu0 0
  %259 = vperm.xlu0 %258, %v245
  %v260 = vpop.permute.xlu0 %259
  %263 = vset.pattern.permute.xlu0 0
  %264 = vperm.xlu0 %263, %v246
  %v265 = vpop.permute.xlu0 %264
  %v271 = vunpack.c.l.b16 %v235
  %v272 = vunpack.c.l.b16 %v236
  %v273 = vunpack.c.l.b16 %v237
  %v274 = vunpack.c.l.b16 %v238
  %v275 = vpack.c.b16 %v272, %v271
  %v276 = vpack.c.b16 %v274, %v273
  %v278 = vsel %vm182, %v275, 0
  %v281 = vsel %vm182, %v276, 0
  %283 = vmatpush.bf16.msra.mxu0 0
  %284 = vmatpush.bf16.msra.mxu0 0
  %285 = vmatpush.bf16.msra.mxu0 0
  %286 = vmatpush.bf16.msra.mxu0 0
  %287 = vmatpush.bf16.msra.mxu0 0
  %288 = vmatpush.bf16.msra.mxu0 0
  %289 = vmatpush.bf16.msra.mxu0 %v241
  %290 = vmatpush.bf16.msra.mxu0 %v239
  %291 = vmatmul.bf16.gmra.mxu0 %v278
  %v292 = vpop.f32.mrf.mxu0
  %v293 = vadd.f32 %v250, %v292
  %v294 = vpop.f32.mrf.mxu0
  %v295 = vadd.f32 %v255, %v294
  %296 = vmatmul.bf16.gmra.mxu0 %v281
  %v297 = vpop.f32.mrf.mxu0
  %v298 = vadd.f32 %v260, %v297
  %v299 = vpop.f32.mrf.mxu0
  %v300 = vadd.f32 %v265, %v299
  %301 = vdwg.mxu0
  %302 = vmatpush.bf16.msra.mxu0 0
  %303 = vmatpush.bf16.msra.mxu0 0
  %304 = vmatpush.bf16.msra.mxu0 0
  %305 = vmatpush.bf16.msra.mxu0 0
  %306 = vmatpush.bf16.msra.mxu0 0
  %307 = vmatpush.bf16.msra.mxu0 0
  %308 = vmatpush.bf16.msra.mxu0 %v242
  %309 = vmatpush.bf16.msra.mxu0 %v240
  %310 = vmatmul.bf16.gmra.mxu0 %v278
  %v311 = vpop.f32.mrf.mxu0
  %v312 = vadd.f32 %v250, %v311
  %v313 = vpop.f32.mrf.mxu0
  %v314 = vadd.f32 %v255, %v313
  %315 = vmatmul.bf16.gmra.mxu0 %v281
  %v316 = vpop.f32.mrf.mxu0
  %v317 = vadd.f32 %v260, %v316
  %v318 = vpop.f32.mrf.mxu0
  %v319 = vadd.f32 %v265, %v318
  %320 = vdwg.mxu0
  %v321 = vmax.f32 %v293, 0.0
  %v322 = vmax.f32 %v312, 0.0
  %v323 = vmax.f32 %v295, 0.0
  %v324 = vmax.f32 %v314, 0.0
  %v325 = vmax.f32 %v298, 0.0
  %v326 = vmax.f32 %v317, 0.0
  %v327 = vmax.f32 %v300, 0.0
  %v328 = vmax.f32 %v319, 0.0
  %v329 = vld [vmem:[%s7] sm:$0xff]
  %v330 = vld [vmem:[%s7 + $0x8] sm:$0xff]
  %v331 = vld [vmem:[%s7 + $0x10] sm:$0xff]
  %v332 = vld [vmem:[%s7 + $0x18] sm:$0xff]
  %334 = vset.pattern.permute.xlu0 0
  %335 = vperm.xlu0 %334, %v329
  %v336 = vpop.permute.xlu0 %335
  %339 = vset.pattern.permute.xlu0 0
  %340 = vperm.xlu0 %339, %v330
  %v341 = vpop.permute.xlu0 %340
  %344 = vset.pattern.permute.xlu0 0
  %345 = vperm.xlu0 %344, %v331
  %v346 = vpop.permute.xlu0 %345
  %349 = vset.pattern.permute.xlu0 0
  %350 = vperm.xlu0 %349, %v332
  %v351 = vpop.permute.xlu0 %350
  %v353 = vmul.f32 %v336, %v321
  %v354 = vmul.f32 %v336, %v322
  %v355 = vmul.f32 %v341, %v323
  %v356 = vmul.f32 %v341, %v324
  %v357 = vmul.f32 %v346, %v325
  %v358 = vmul.f32 %v346, %v326
  %v359 = vmul.f32 %v351, %v327
  %v360 = vmul.f32 %v351, %v328
  %v361 = vadd.f32 %v353, %v355
  %v362 = vadd.f32 %v361, %v357
  %v363 = vadd.f32 %v362, %v359
  %v364 = vrot.slane %v363, 4
  %v365 = vadd.f32 %v363, %v364
  %v366 = vrot.slane %v365, 2
  %v367 = vadd.f32 %v365, %v366
  %v368 = vrot.slane %v367, 1
  %v369 = vadd.f32 %v367, %v368
  %v370 = vadd.f32 %v354, %v356
  %v371 = vadd.f32 %v370, %v358
  %v372 = vadd.f32 %v371, %v360
  %v373 = vrot.slane %v372, 4
  %v374 = vadd.f32 %v372, %v373
  %v375 = vrot.slane %v374, 2
  %v376 = vadd.f32 %v374, %v375
  %v377 = vrot.slane %v376, 1
  %v378 = vadd.f32 %v376, %v377
  %379 = vset.pattern.permute.xlu0 1
  %380 = vperm.xlu0 %379, %v329
  %v381 = vpop.permute.xlu0 %380
  %383 = vset.pattern.permute.xlu0 1
  %384 = vperm.xlu0 %383, %v330
  %v385 = vpop.permute.xlu0 %384
  %387 = vset.pattern.permute.xlu0 1
  %388 = vperm.xlu0 %387, %v331
  %v389 = vpop.permute.xlu0 %388
  %391 = vset.pattern.permute.xlu0 1
  %392 = vperm.xlu0 %391, %v332
  %v393 = vpop.permute.xlu0 %392
  %v395 = vmul.f32 %v381, %v321
  %v396 = vmul.f32 %v381, %v322
  %v397 = vmul.f32 %v385, %v323
  %v398 = vmul.f32 %v385, %v324
  %v399 = vmul.f32 %v389, %v325
  %v400 = vmul.f32 %v389, %v326
  %v401 = vmul.f32 %v393, %v327
  %v402 = vmul.f32 %v393, %v328
  %v403 = vadd.f32 %v395, %v397
  %v404 = vadd.f32 %v403, %v399
  %v405 = vadd.f32 %v404, %v401
  %v406 = vrot.slane %v405, 4
  %v407 = vadd.f32 %v405, %v406
  %v408 = vrot.slane %v407, 2
  %v409 = vadd.f32 %v407, %v408
  %v410 = vrot.slane %v409, 1
  %v411 = vadd.f32 %v409, %v410
  %v412 = vadd.f32 %v396, %v398
  %v413 = vadd.f32 %v412, %v400
  %v414 = vadd.f32 %v413, %v402
  %v415 = vrot.slane %v414, 4
  %v416 = vadd.f32 %v414, %v415
  %v417 = vrot.slane %v416, 2
  %v418 = vadd.f32 %v416, %v417
  %v419 = vrot.slane %v418, 1
  %v420 = vadd.f32 %v418, %v419
  %vm421 = vcmask 1040384
  %v422 = vsel %vm421, %v369, %v411
  %v423 = vsel %vm421, %v378, %v420
  %v424 = vld [vmem:[%s8] sm:$0x3]
  %426 = vset.pattern.permute.xlu0 0
  %427 = vperm.xlu0 %426, %v424
  %v428 = vpop.permute.xlu0 %427
  %v430 = vadd.f32 %v422, %v428
  %v431 = vadd.f32 %v423, %v428
  %v434 = vrot.slane %v431, 6
  %v435 = vsel %vm84, %v430, %v434
  %437 = vst [vmem:[%s9] sm:$0xf] %v435
  // Predicated region
  $region38: #{_forward_impl.1} parent=0 // pred_check
    _
  $region39: #{_forward_impl.1} parent=0 // pred_check_branch
    %439 = sbr.rel (0) target = $region41
  $region40: #{_forward_impl.1} parent=0 // pred_region
    _
  $region41: #{_forward_impl.1} parent=0 // pred_fallthru
    _
  // Predicated region
  $region42: #{_forward_impl.1} parent=0 // pred_check
    _
  $region43: #{_forward_impl.1} parent=0 // pred_check_branch
    %441 = sbr.rel (0) target = $region45
  $region44: #{_forward_impl.1} parent=0 // pred_region
    _
  $region45: #{_forward_impl.1} parent=0 // pred_fallthru
    _

</llo_original>
